<compile_context>
chip_gen: v5e
topology: v5e:2x2
jax: 0.10.0
libtpu: 0.0.40
codegen_flags: <defaults>
</compile_context>

<pallas_src>
import functools

import jax
import jax.numpy as jnp
from jax import lax
from jax.experimental import pallas as pl
from jax.experimental.pallas import tpu as pltpu


def _kl_pixelwise_kernel(s_ref, t_ref, out_ref, *, wh, tile_px, needs_mask):
    """One (C, tile_px) tile of one image.

    s_ref, t_ref: (C, tile_px) logits, pixels on the lane axis.
    out_ref:      (1, tile_px) per-lane partial KL sums, resident across the
                  pixel-tile grid axis (accumulator).
    """
    p = pl.program_id(1)

    @pl.when(p == 0)
    def _():
        out_ref[...] = jnp.zeros_like(out_ref)

    s = s_ref[...].astype(jnp.float32)  # (C, tile_px)
    t = t_ref[...].astype(jnp.float32)

    if needs_mask:
        # Zero out out-of-range pixel columns (uniform vs uniform -> KL == 0).
        col = p * tile_px + lax.broadcasted_iota(jnp.int32, s.shape, 1)
        valid = col < wh
        s = jnp.where(valid, s, 0.0)
        t = jnp.where(valid, t, 0.0)

    # Student log_softmax along the channel (sublane) axis.
    s_max = jnp.max(s, axis=0, keepdims=True)
    s_shift = s - s_max
    s_lse = jnp.log(jnp.sum(jnp.exp(s_shift), axis=0, keepdims=True))
    log_p_s = s_shift - s_lse

    # Teacher softmax / log_softmax along the channel axis.
    t_max = jnp.max(t, axis=0, keepdims=True)
    t_shift = t - t_max
    t_exp = jnp.exp(t_shift)
    t_sum = jnp.sum(t_exp, axis=0, keepdims=True)
    log_p_t = t_shift - jnp.log(t_sum)

    # Per-pixel KL = (1/t_sum) * sum_c t_exp * (log_p_t - log_p_s)
    # (reciprocal hoisted out of the per-channel product: one per pixel).
    inner = jnp.sum(t_exp * (log_p_t - log_p_s), axis=0, keepdims=True)
    row_kl = inner * pl.reciprocal(t_sum, approx=False)

    out_ref[...] += row_kl  # (1, tile_px)


@functools.partial(jax.jit, static_argnames=("tile_px",))
def criterion_kl_pixel_wise(preds_S, preds_T, tile_px=2048):
    """preds_S, preds_T: (N, C, W, H) arrays (NCHW, like PyTorch)."""
    assert preds_S.shape == preds_T.shape, "the output dim of teacher and student differ"
    N, C, W, H = preds_S.shape
    WH = W * H

    # Free reshape: channels stay on the sublane axis, pixels on the lane axis.
    s3 = preds_S.reshape(N, C, WH)
    t3 = preds_T.reshape(N, C, WH)

    # Pick the pixel-tile size: full extent if it fits, else a multiple of 128.
    if WH <= tile_px:
        tile = WH
    else:
        tile = max(128, (tile_px // 128) * 128)
    needs_mask = (WH % tile) != 0
    num_p = pl.cdiv(WH, tile)

    kernel = functools.partial(
        _kl_pixelwise_kernel, wh=WH, tile_px=tile, needs_mask=needs_mask
    )

    # Per-image, per-lane partial sums; final scalar reduce happens in XLA.
    partials = pl.pallas_call(
        kernel,
        out_shape=jax.ShapeDtypeStruct((N, 1, tile), jnp.float32),
        grid_spec=pltpu.PrefetchScalarGridSpec(
            num_scalar_prefetch=0,
            grid=(N, num_p),
            in_specs=[
                pl.BlockSpec((None, C, tile), lambda n, p: (n, 0, p)),
                pl.BlockSpec((None, C, tile), lambda n, p: (n, 0, p)),
            ],
            out_specs=pl.BlockSpec((None, 1, tile), lambda n, p: (n, 0, 0)),
        ),
        compiler_params=pltpu.CompilerParams(
            dimension_semantics=("parallel", "arbitrary"),
        ),
    )(s3, t3)

    # batchmean over W*H pixels per image, then mean over N images.
    return jnp.sum(partials) / jnp.float32(N * WH)


def _reference_jax(preds_S, preds_T):
    """Pure-JAX reference mirroring the PyTorch module."""
    N, C, W, H = preds_S.shape
    s2d = jnp.transpose(preds_S, (0, 2, 3, 1)).reshape(-1, C).astype(jnp.float32)
    t2d = jnp.transpose(preds_T, (0, 2, 3, 1)).reshape(-1, C).astype(jnp.float32)
    log_p_s = jax.nn.log_softmax(s2d, axis=1)
    p_t = jax.nn.softmax(t2d, axis=1)
    log_p_t = jax.nn.log_softmax(t2d, axis=1)
    kl = jnp.sum(p_t * (log_p_t - log_p_s))
    return kl / (N * W * H)


if __name__ == "__main__":
    key = jax.random.PRNGKey(0)
    k1, k2, k3, k4 = jax.random.split(key, 4)

    # Primary small test (matches the module's implied shapes).
    N, C, W, H = 2, 4, 16, 16
    preds_S = jax.random.normal(k1, (N, C, W, H), dtype=jnp.float32)
    preds_T = jax.random.normal(k2, (N, C, W, H), dtype=jnp.float32)

    loss = jax.block_until_ready(criterion_kl_pixel_wise(preds_S, preds_T))
    ref = jax.block_until_ready(_reference_jax(preds_S, preds_T))
    assert jnp.allclose(loss, ref, atol=1e-5, rtol=1e-5), (loss, ref)

    # Second test exercising the ragged-tail masking path (WH=225, tile=128).
    N2, C2, W2, H2 = 2, 4, 15, 15
    s2 = jax.random.normal(k3, (N2, C2, W2, H2), dtype=jnp.float32)
    t2 = jax.random.normal(k4, (N2, C2, W2, H2), dtype=jnp.float32)
    loss2 = jax.block_until_ready(criterion_kl_pixel_wise(s2, t2, tile_px=128))
    ref2 = jax.block_until_ready(_reference_jax(s2, t2))
    assert jnp.allclose(loss2, ref2, atol=1e-5, rtol=1e-5), (loss2, ref2)

    print("KERNEL_OK")
</pallas_src>

<mosaic_0001>
module attributes {stable_mosaic.version = 11 : i64} {
  func.func @_kl_pixelwise_kernel(%arg0: i32, %arg1: i32, %arg2: memref<1x4x256xf32, #tpu.memory_space<vmem>>, %arg3: memref<1x4x256xf32, #tpu.memory_space<vmem>>, %arg4: memref<1x1x256xf32, #tpu.memory_space<vmem>>) attributes {dimension_semantics = [#tpu.dimension_semantics<parallel>, #tpu.dimension_semantics<arbitrary>], iteration_bounds = array<i64: 2, 1>, scalar_prefetch = 0 : i64, scratch_operands = 0 : i64, tpu.core_type = #tpu.core_type<tc>, window_params = [{transform_indices = @transform_0, window_bounds = array<i64: 1, 4, 256>}, {transform_indices = @transform_1, window_bounds = array<i64: 1, 4, 256>}, {transform_indices = @transform_2, window_bounds = array<i64: 1, 1, 256>}]} {
    %c0_i32 = arith.constant 0 : i32
    %0 = arith.cmpi eq, %arg1, %c0_i32 : i32
    %1 = arith.extui %0 : i1 to i32
    %c0_i32_0 = arith.constant 0 : i32
    %2 = arith.cmpi ne, %1, %c0_i32_0 : i32
    scf.if %2 {
      %cst_16 = arith.constant 0.000000e+00 : f32
      %39 = vector.broadcast %cst_16 : f32 to vector<1x256xf32>
      %c0_17 = arith.constant 0 : index
      %c0_18 = arith.constant 0 : index
      %c0_19 = arith.constant 0 : index
      %40 = vector.load %arg4[%c0_17, %c0_18, %c0_19] : memref<1x1x256xf32, #tpu.memory_space<vmem>>, vector<1x1x256xf32>
      %41 = vector.shape_cast %40 : vector<1x1x256xf32> to vector<1x256xf32>
      %42 = vector.shape_cast %39 : vector<1x256xf32> to vector<1x1x256xf32>
      tpu.vector_store %arg4[%c0_17, %c0_18, %c0_19], %42 {strides = array<i32>} : memref<1x1x256xf32, #tpu.memory_space<vmem>>, vector<1x1x256xf32>,
    } else {
    }
    %c0 = arith.constant 0 : index
    %c0_1 = arith.constant 0 : index
    %c0_2 = arith.constant 0 : index
    %3 = vector.load %arg2[%c0, %c0_1, %c0_2] : memref<1x4x256xf32, #tpu.memory_space<vmem>>, vector<1x4x256xf32>
    %4 = vector.shape_cast %3 : vector<1x4x256xf32> to vector<4x256xf32>
    %c0_3 = arith.constant 0 : index
    %c0_4 = arith.constant 0 : index
    %c0_5 = arith.constant 0 : index
    %5 = vector.load %arg3[%c0_3, %c0_4, %c0_5] : memref<1x4x256xf32, #tpu.memory_space<vmem>>, vector<1x4x256xf32>
    %6 = vector.shape_cast %5 : vector<1x4x256xf32> to vector<4x256xf32>
    %cst = arith.constant dense<0xFF800000> : vector<256xf32>
    %7 = vector.multi_reduction <maximumf>, %4, %cst [0] : vector<4x256xf32> to vector<256xf32>
    %8 = vector.shape_cast %7 : vector<256xf32> to vector<1x256xf32>
    %9 = vector.broadcast %8 : vector<1x256xf32> to vector<4x256xf32>
    %10 = arith.subf %4, %9 : vector<4x256xf32>
    %11 = math.exp %10 : vector<4x256xf32>
    %cst_6 = arith.constant dense<0.000000e+00> : vector<256xf32>
    %12 = vector.multi_reduction <add>, %11, %cst_6 [0] : vector<4x256xf32> to vector<256xf32>
    %13 = vector.shape_cast %12 : vector<256xf32> to vector<1x256xf32>
    %14 = math.log %13 : vector<1x256xf32>
    %15 = vector.broadcast %14 : vector<1x256xf32> to vector<4x256xf32>
    %16 = arith.subf %10, %15 : vector<4x256xf32>
    %cst_7 = arith.constant dense<0xFF800000> : vector<256xf32>
    %17 = vector.multi_reduction <maximumf>, %6, %cst_7 [0] : vector<4x256xf32> to vector<256xf32>
    %18 = vector.shape_cast %17 : vector<256xf32> to vector<1x256xf32>
    %19 = vector.broadcast %18 : vector<1x256xf32> to vector<4x256xf32>
    %20 = arith.subf %6, %19 : vector<4x256xf32>
    %21 = math.exp %20 : vector<4x256xf32>
    %cst_8 = arith.constant dense<0.000000e+00> : vector<256xf32>
    %22 = vector.multi_reduction <add>, %21, %cst_8 [0] : vector<4x256xf32> to vector<256xf32>
    %23 = vector.shape_cast %22 : vector<256xf32> to vector<1x256xf32>
    %24 = math.log %23 : vector<1x256xf32>
    %25 = vector.broadcast %24 : vector<1x256xf32> to vector<4x256xf32>
    %26 = arith.subf %20, %25 : vector<4x256xf32>
    %27 = arith.subf %26, %16 : vector<4x256xf32>
    %28 = arith.mulf %21, %27 : vector<4x256xf32>
    %cst_9 = arith.constant dense<0.000000e+00> : vector<256xf32>
    %29 = vector.multi_reduction <add>, %28, %cst_9 [0] : vector<4x256xf32> to vector<256xf32>
    %30 = vector.shape_cast %29 : vector<256xf32> to vector<1x256xf32>
    %31 = tpu.reciprocal %23 : vector<1x256xf32> -> vector<1x256xf32>
    %32 = arith.mulf %30, %31 : vector<1x256xf32>
    %c0_10 = arith.constant 0 : index
    %c0_11 = arith.constant 0 : index
    %c0_12 = arith.constant 0 : index
    %33 = vector.load %arg4[%c0_10, %c0_11, %c0_12] : memref<1x1x256xf32, #tpu.memory_space<vmem>>, vector<1x1x256xf32>
    %34 = vector.shape_cast %33 : vector<1x1x256xf32> to vector<1x256xf32>
    %35 = arith.addf %34, %32 : vector<1x256xf32>
    %c0_13 = arith.constant 0 : index
    %c0_14 = arith.constant 0 : index
    %c0_15 = arith.constant 0 : index
    %36 = vector.load %arg4[%c0_13, %c0_14, %c0_15] : memref<1x1x256xf32, #tpu.memory_space<vmem>>, vector<1x1x256xf32>
    %37 = vector.shape_cast %36 : vector<1x1x256xf32> to vector<1x256xf32>
    %38 = vector.shape_cast %35 : vector<1x256xf32> to vector<1x1x256xf32>
    tpu.vector_store %arg4[%c0_13, %c0_14, %c0_15], %38 {strides = array<i32>} : memref<1x1x256xf32, #tpu.memory_space<vmem>>, vector<1x1x256xf32>,
    return
  }
  func.func @transform_0(%arg0: i32, %arg1: i32) -> (i32, i32, i32) {
    %c0_i32 = arith.constant 0 : i32
    %c0_i32_0 = arith.constant 0 : i32
    return %arg0, %c0_i32, %arg1 : i32, i32, i32
  }
  func.func @transform_1(%arg0: i32, %arg1: i32) -> (i32, i32, i32) {
    %c0_i32 = arith.constant 0 : i32
    %c0_i32_0 = arith.constant 0 : i32
    return %arg0, %c0_i32, %arg1 : i32, i32, i32
  }
  func.func @transform_2(%arg0: i32, %arg1: i32) -> (i32, i32, i32) {
    %c0_i32 = arith.constant 0 : i32
    %c0_i32_0 = arith.constant 0 : i32
    %c0_i32_1 = arith.constant 0 : i32
    return %arg0, %c0_i32, %c0_i32_0 : i32, i32, i32
  }
}

</mosaic_0001>

<llo_original>
// kernel: criterion_kl_pixel_wise.1
$region0: #{criterion_kl_pixel_wise.1}
  #allocation0 [shape = 'u32[]', space=smem, size = 0x4, offset = 0x4, fixed_abs, tag = 'smem constant byte address 0x4 - core index']
  #allocation1 [shape = 'u32[72,128]{1,0:T(1,128)}', space=vmem, size = 0x9000, scoped, tag = 'internal scratch']
  %s0 = inlined_call_operand.vmem [shape: f32[2,4,256], index: 0, kind: input, shape index: {}]
  %s1 = inlined_call_operand.vmem [shape: f32[2,4,256], index: 1, kind: input, shape index: {}]
  %s2 = inlined_call_operand.vmem [shape: f32[2,1,256], index: 2, kind: output, shape index: {}]
  %s3 = sld [smem:[#allocation0]]
  $region45: #{criterion_kl_pixel_wise.1} parent=0
    _
  %s5 = ssub.s32 1, %s3
  %s6 = scalar_select 0, %s5, %s3
  loop: start=0, step=1, limit=4
  $region2: #{criterion_kl_pixel_wise.1} parent=0 // loop_pre_header
    _
  $region3: #{criterion_kl_pixel_wise.1} parent=0 // loop_header
    %s8 = sphi 0, %s12
    %p9 = scmp.ge.s32.totalorder %s8, 4
    %s15 = sphi 0, %s27
    %s16 = sphi 0, %s23
    %s17 = sphi 0, %s15
    %s18 = sphi 0, %s16
    %s19 = sphi 0, %s17
    %s20 = sphi 0, %s18
    %s32 = sphi 0, %s34
    %s35 = sphi 0, %s32
    %s36 = sphi 0, %s35
    %s52 = sphi 0, %s36
    %s60 = sphi 0, %s62
    %s63 = sphi 0, %s60
    %s64 = sphi 0, %s63
    %s80 = sphi 0, %s64
    %s86 = sphi 0, %s88
    %s89 = sphi 0, %s86
    %s90 = sphi 0, %s89
    %s106 = sphi 0, %s90
  $region4: #{criterion_kl_pixel_wise.1} parent=0 // loop_header_branch
    %11 = sbr.rel (%p9) target = $region8
  $region5: #{criterion_kl_pixel_wise.1} parent=0 // loop_body
    %s13 = ssub.s32 %s8, 1
    %s14 = ssub.s32 %s8, 2
    %s21 = sadd.s32 1, %s16
    %p22 = scmp.ge.s32.totalorder %s21, 1
    %s23 = scalar_select %p22, 0, %s21
    %s24 = sadd.s32 1, %s15
    %s25 = scalar_select %p22, %s24, %s15
    %p26 = scmp.ge.s32.totalorder %s25, 2
    %s27 = scalar_select %p26, 0, %s25
    %s28 = ssub.s32 %s15, %s27
    %s29 = ssub.s32 %s16, %s23
    %s30 = sor.u32 %s28, %s29
    %p31 = scmp.eq.s32.totalorder %s30, 0
    %s33 = sadd.s32 %s32, 1
    %s34 = scalar_select %p31, %s32, %s33
    %p37 = pneg %p31
    %p38 = scmp.eq.s32.totalorder %s8, 1
    %p39 = por %p37, %p38
    %p40 = scmp.ne.s32.totalorder %s32, %s35
    %p41 = scmp.eq.s32.totalorder %s8, 0
    %p42 = por %p40, %p41
    %p43 = scmp.ne.s32.totalorder %s32, %s35
    %p44 = scmp.eq.s32.totalorder %s13, 1
    %p45 = por %p43, %p44
    %p46 = scmp.ne.s32.totalorder %s35, %s36
    %p47 = scmp.eq.s32.totalorder %s13, 0
    %p48 = por %p46, %p47
    %p49 = scmp.ne.s32.totalorder %s35, %s36
    %p50 = scmp.eq.s32.totalorder %s14, 1
    %p51 = por %p49, %p50
    %p53 = scmp.ne.s32.totalorder %s36, %s52
    %p54 = scmp.eq.s32.totalorder %s14, 0
    %p55 = por %p53, %p54
    %s56 = ssub.s32 %s15, %s27
    %s57 = ssub.s32 %s16, %s23
    %s58 = sor.u32 %s56, %s57
    %p59 = scmp.eq.s32.totalorder %s58, 0
    %s61 = sadd.s32 %s60, 1
    %s62 = scalar_select %p59, %s60, %s61
    %p65 = pneg %p59
    %p66 = scmp.eq.s32.totalorder %s8, 1
    %p67 = por %p65, %p66
    %p68 = scmp.ne.s32.totalorder %s60, %s63
    %p69 = scmp.eq.s32.totalorder %s8, 0
    %p70 = por %p68, %p69
    %p71 = scmp.ne.s32.totalorder %s60, %s63
    %p72 = scmp.eq.s32.totalorder %s13, 1
    %p73 = por %p71, %p72
    %p74 = scmp.ne.s32.totalorder %s63, %s64
    %p75 = scmp.eq.s32.totalorder %s13, 0
    %p76 = por %p74, %p75
    %p77 = scmp.ne.s32.totalorder %s63, %s64
    %p78 = scmp.eq.s32.totalorder %s14, 1
    %p79 = por %p77, %p78
    %p81 = scmp.ne.s32.totalorder %s64, %s80
    %p82 = scmp.eq.s32.totalorder %s14, 0
    %p83 = por %p81, %p82
    %s84 = ssub.s32 %s15, %s27
    %p85 = scmp.eq.s32.totalorder %s84, 0
    %s87 = sadd.s32 %s86, 1
    %s88 = scalar_select %p85, %s86, %s87
    %p91 = pneg %p85
    %p92 = scmp.eq.s32.totalorder %s8, 1
    %p93 = por %p91, %p92
    %p94 = scmp.ne.s32.totalorder %s86, %s89
    %p95 = scmp.eq.s32.totalorder %s8, 0
    %p96 = por %p94, %p95
    %p97 = scmp.ne.s32.totalorder %s86, %s89
    %p98 = scmp.eq.s32.totalorder %s13, 1
    %p99 = por %p97, %p98
    %p100 = scmp.ne.s32.totalorder %s89, %s90
    %p101 = scmp.eq.s32.totalorder %s13, 0
    %p102 = por %p100, %p101
    %p103 = scmp.ne.s32.totalorder %s89, %s90
    %p104 = scmp.eq.s32.totalorder %s14, 1
    %p105 = por %p103, %p104
    %p107 = scmp.ne.s32.totalorder %s90, %s106
    %p108 = scmp.eq.s32.totalorder %s14, 0
    %p109 = por %p107, %p108
    %p110 = scmp.le.s32.totalorder 1, %s8
    %p111 = scmp.lt.s32.totalorder %s8, 3
    %p112 = pnand %p110, %p111
    %p113 = pneg %p112
    // Predicated region
    $region9: #{criterion_kl_pixel_wise.1} parent=5 // pred_check
      _
    $region10: #{criterion_kl_pixel_wise.1} parent=5 // pred_check_branch
      %115 = sbr.rel (%p112) target = $region12
    $region11: #{criterion_kl_pixel_wise.1} parent=5 // pred_region
      %s116 = ssub.s32 %s8, 1
    $region12: #{criterion_kl_pixel_wise.1} parent=5 // pred_fallthru
      _
    %p117 = scmp.lt.s32.totalorder %s8, 2
    // Predicated region
    $region13: #{criterion_kl_pixel_wise.1} parent=5 // pred_check
      %p118 = pneg %p117
    $region14: #{criterion_kl_pixel_wise.1} parent=5 // pred_check_branch
      %120 = sbr.rel (%p118) target = $region16
    $region15: #{criterion_kl_pixel_wise.1} parent=5 // pred_region
      // Predicated region
      $region17: #{criterion_kl_pixel_wise.1} parent=15 // pred_check
        %p121 = pneg %p42
      $region18: #{criterion_kl_pixel_wise.1} parent=15 // pred_check_branch
        %123 = sbr.rel (%p121) target = $region20
      $region19: #{criterion_kl_pixel_wise.1} parent=15 // pred_region
        %s124 = smul.u32 2, %s16
        %p125 = scmp.lt.s32.totalorder %s15, 1
        %s126 = scalar_select %p125, %s15, 1
        %p127 = scmp.lt.s32.totalorder %s124, 1
        %s128 = scalar_select %p127, %s124, 1
        %s129 = smul.addr %s126, 2
        %s130 = sadd.s32 %s128, %s129
        %s131 = smul.addr %s130, 4
        %s132 = scalar_lea.vmem %s0, %s131
        %s133 = smul.u32 2, %s16
      $region20: #{criterion_kl_pixel_wise.1} parent=15 // pred_fallthru
        _
      // Predicated region
      $region21: #{criterion_kl_pixel_wise.1} parent=15 // pred_check
        %p134 = pneg %p70
      $region22: #{criterion_kl_pixel_wise.1} parent=15 // pred_check_branch
        %136 = sbr.rel (%p134) target = $region24
      $region23: #{criterion_kl_pixel_wise.1} parent=15 // pred_region
        %s137 = smul.u32 2, %s16
        %p138 = scmp.lt.s32.totalorder %s15, 1
        %s139 = scalar_select %p138, %s15, 1
        %p140 = scmp.lt.s32.totalorder %s137, 1
        %s141 = scalar_select %p140, %s137, 1
        %s142 = smul.addr %s139, 2
        %s143 = sadd.s32 %s141, %s142
        %s144 = smul.addr %s143, 4
        %s145 = scalar_lea.vmem %s1, %s144
        %s146 = smul.u32 2, %s16
      $region24: #{criterion_kl_pixel_wise.1} parent=15 // pred_fallthru
        _
    $region16: #{criterion_kl_pixel_wise.1} parent=5 // pred_fallthru
      _
    %p147 = scmp.le.s32.totalorder 1, %s8
    %p148 = scmp.lt.s32.totalorder %s8, 3
    %p149 = pnand %p147, %p148
    %p150 = pneg %p149
    // Predicated region
    $region25: #{criterion_kl_pixel_wise.1} parent=5 // pred_check
      _
    $region26: #{criterion_kl_pixel_wise.1} parent=5 // pred_check_branch
      %152 = sbr.rel (%p149) target = $region28
    $region27: #{criterion_kl_pixel_wise.1} parent=5 // pred_region
      %s153 = ssub.s32 %s8, 1
      %s154 = smul.u32 2, %s18
      %p155 = scmp.lt.s32.totalorder %s17, 1
      %s156 = scalar_select %p155, %s17, 1
      %p157 = scmp.lt.s32.totalorder %s154, 1
      %s158 = scalar_select %p157, %s154, 1
      %s159 = smul.addr %s156, 2
      %s160 = sadd.s32 %s158, %s159
      %s161 = smul.addr %s160, 4
      %s162 = scalar_lea.vmem %s0, %s161
      %p163 = pneg %p48
      %p164 = pneg %p45
      %s165 = smul.u32 2, %s18
      %p166 = scmp.lt.s32.totalorder %s17, 1
      %s167 = scalar_select %p166, %s17, 1
      %p168 = scmp.lt.s32.totalorder %s165, 1
      %s169 = scalar_select %p168, %s165, 1
      %s170 = smul.addr %s167, 2
      %s171 = sadd.s32 %s169, %s170
      %s172 = smul.addr %s171, 4
      %s173 = scalar_lea.vmem %s1, %s172
      %p174 = pneg %p76
      %p175 = pneg %p73
      %p176 = pneg %p102
      %p177 = pneg %p99
      %p178 = scmp.lt.s32.totalorder %s17, 1
      %s179 = scalar_select %p178, %s17, 1
      %s180 = smul.addr %s179, 2
      %s181 = scalar_lea.vmem %s2, %s180
      %s182 = smul.u32 2, %s18
      %p183 = scmp.lt.s32.totalorder %s17, 1
      %s184 = scalar_select %p183, %s17, 1
      %p185 = scmp.lt.s32.totalorder %s182, 1
      %s186 = scalar_select %p185, %s182, 1
      %s187 = smul.addr %s184, 2
      %s188 = sadd.s32 %s186, %s187
      %s189 = smul.addr %s188, 4
      %s190 = scalar_lea.vmem %s0, %s189
      %s191 = smul.u32 2, %s18
      %s192 = smul.u32 2, %s18
      %p193 = scmp.lt.s32.totalorder %s17, 1
      %s194 = scalar_select %p193, %s17, 1
      %p195 = scmp.lt.s32.totalorder %s192, 1
      %s196 = scalar_select %p195, %s192, 1
      %s197 = smul.addr %s194, 2
      %s198 = sadd.s32 %s196, %s197
      %s199 = smul.addr %s198, 4
      %s200 = scalar_lea.vmem %s1, %s199
      %s201 = smul.u32 2, %s18
      %p202 = scmp.lt.s32.totalorder %s17, 1
      %s203 = scalar_select %p202, %s17, 1
      %s204 = smul.addr %s203, 2
      %s205 = scalar_lea.vmem %s2, %s204
      %p206 = scmp.eq.s32.totalorder %s18, 0
      // Predicated region
      $region29: #{criterion_kl_pixel_wise.1} parent=27 // pred_check
        %p207 = pneg %p206
      $region30: #{criterion_kl_pixel_wise.1} parent=27 // pred_check_branch
        %209 = sbr.rel (%p207) target = $region32
      $region31: #{criterion_kl_pixel_wise.1} parent=27 // pred_region
        %v210 = vlaneseq
        %vm211 = vcmp.ge.s32.totalorder %v210, 0
        %vm212 = vcmp.lt.s32.totalorder %v210, 256
        %vm213 = vmand %vm211, %vm212
        %214 = vst.msk [vmem:[%s205] sm:$0x3] %vm213, 0.0
      $region32: #{criterion_kl_pixel_wise.1} parent=27 // pred_fallthru
        _
      %v215 = vld [vmem:[%s190] sm:$0xff]
      %v216 = vld [vmem:[%s200] sm:$0xff]
      %218 = vst [vmem:[#allocation1] ss:$2 sm:$0xff] %v215
      %v219 = vld.sshfl [vmem:[#allocation1] sm:$0xff pattern:$0x75316420]
      %v220 = vld.sshfl [vmem:[#allocation1 + $0x8] sm:$0xff pattern:$0x75316420]
      %vm223 = vcmask 1043456
      %v224 = vsel %vm223, %v219, -inf
      %v225 = vrot.slane %v224, 4
      %v226 = vmax.f32 %v224, %v225
      %v227 = vrot.slane %v226, 2
      %v228 = vmax.f32 %v226, %v227
      %v229 = vrot.slane %v228, 1
      %v230 = vmax.f32 %v228, %v229
      %v231 = vsel %vm223, %v220, -inf
      %v232 = vrot.slane %v231, 4
      %v233 = vmax.f32 %v231, %v232
      %v234 = vrot.slane %v233, 2
      %v235 = vmax.f32 %v233, %v234
      %v236 = vrot.slane %v235, 1
      %v237 = vmax.f32 %v235, %v236
      %v240 = vrot.slane %v237, 4
      %v241 = vsel %vm223, %v230, %v240
      %v243 = vsub.f32 %v215, %v241
      %v244 = vmul.f32 %v243, 1.442695
      %v245 = vpow.pop %v244
      %247 = vst [vmem:[#allocation1] ss:$2 sm:$0xff] %v245
      %v248 = vld.sshfl [vmem:[#allocation1] sm:$0xff pattern:$0x75316420]
      %v249 = vld.sshfl [vmem:[#allocation1 + $0x8] sm:$0xff pattern:$0x75316420]
      %v252 = vsel %vm223, %v248, 0.0
      %v253 = vrot.slane %v252, 4
      %v254 = vadd.f32 %v252, %v253
      %v255 = vrot.slane %v254, 2
      %v256 = vadd.f32 %v254, %v255
      %v257 = vrot.slane %v256, 1
      %v258 = vadd.f32 %v256, %v257
      %v259 = vsel %vm223, %v249, 0.0
      %v260 = vrot.slane %v259, 4
      %v261 = vadd.f32 %v259, %v260
      %v262 = vrot.slane %v261, 2
      %v263 = vadd.f32 %v261, %v262
      %v264 = vrot.slane %v263, 1
      %v265 = vadd.f32 %v263, %v264
      %v266 = vlog2.pop %v258
      %v267 = vmul.f32 %v266, 0.6931472
      %v268 = vlog2.pop %v265
      %v269 = vmul.f32 %v268, 0.6931472
      %v272 = vrot.slane %v269, 4
      %v273 = vsel %vm223, %v267, %v272
      %v275 = vsub.f32 %v243, %v273
      %277 = vst [vmem:[#allocation1] ss:$2 sm:$0xff] %v216
      %v278 = vld.sshfl [vmem:[#allocation1] sm:$0xff pattern:$0x75316420]
      %v279 = vld.sshfl [vmem:[#allocation1 + $0x8] sm:$0xff pattern:$0x75316420]
      %v282 = vsel %vm223, %v278, -inf
      %v283 = vrot.slane %v282, 4
      %v284 = vmax.f32 %v282, %v283
      %v285 = vrot.slane %v284, 2
      %v286 = vmax.f32 %v284, %v285
      %v287 = vrot.slane %v286, 1
      %v288 = vmax.f32 %v286, %v287
      %v289 = vsel %vm223, %v279, -inf
      %v290 = vrot.slane %v289, 4
      %v291 = vmax.f32 %v289, %v290
      %v292 = vrot.slane %v291, 2
      %v293 = vmax.f32 %v291, %v292
      %v294 = vrot.slane %v293, 1
      %v295 = vmax.f32 %v293, %v294
      %v298 = vrot.slane %v295, 4
      %v299 = vsel %vm223, %v288, %v298
      %v301 = vsub.f32 %v216, %v299
      %v302 = vmul.f32 %v301, 1.442695
      %v303 = vpow.pop %v302
      %305 = vst [vmem:[#allocation1] ss:$2 sm:$0xff] %v303
      %v306 = vld.sshfl [vmem:[#allocation1] sm:$0xff pattern:$0x75316420]
      %v307 = vld.sshfl [vmem:[#allocation1 + $0x8] sm:$0xff pattern:$0x75316420]
      %v310 = vsel %vm223, %v306, 0.0
      %v311 = vrot.slane %v310, 4
      %v312 = vadd.f32 %v310, %v311
      %v313 = vrot.slane %v312, 2
      %v314 = vadd.f32 %v312, %v313
      %v315 = vrot.slane %v314, 1
      %v316 = vadd.f32 %v314, %v315
      %v317 = vsel %vm223, %v307, 0.0
      %v318 = vrot.slane %v317, 4
      %v319 = vadd.f32 %v317, %v318
      %v320 = vrot.slane %v319, 2
      %v321 = vadd.f32 %v319, %v320
      %v322 = vrot.slane %v321, 1
      %v323 = vadd.f32 %v321, %v322
      %v324 = vlog2.pop %v316
      %v325 = vmul.f32 %v324, 0.6931472
      %v326 = vlog2.pop %v323
      %v327 = vmul.f32 %v326, 0.6931472
      %v330 = vrot.slane %v327, 4
      %v331 = vsel %vm223, %v325, %v330
      %v333 = vsub.f32 %v301, %v331
      %v334 = vsub.f32 %v333, %v275
      %v335 = vmul.f32 %v303, %v334
      %337 = vst [vmem:[#allocation1] ss:$2 sm:$0xff] %v335
      %v338 = vld.sshfl [vmem:[#allocation1] sm:$0xff pattern:$0x75316420]
      %v339 = vld.sshfl [vmem:[#allocation1 + $0x8] sm:$0xff pattern:$0x75316420]
      %v342 = vsel %vm223, %v338, 0.0
      %v343 = vrot.slane %v342, 4
      %v344 = vadd.f32 %v342, %v343
      %v345 = vrot.slane %v344, 2
      %v346 = vadd.f32 %v344, %v345
      %v347 = vrot.slane %v346, 1
      %v348 = vadd.f32 %v346, %v347
      %v349 = vsel %vm223, %v339, 0.0
      %v350 = vrot.slane %v349, 4
      %v351 = vadd.f32 %v349, %v350
      %v352 = vrot.slane %v351, 2
      %v353 = vadd.f32 %v351, %v352
      %v354 = vrot.slane %v353, 1
      %v355 = vadd.f32 %v353, %v354
      %v356 = vrcp.pop %v316
      %v357 = vmul.f32 %v316, %v356
      %v358 = vsub.f32 1.0, %v357
      %v359 = vmul.f32 %v356, %v358
      %v360 = vadd.f32 %v356, %v359
      %vm361 = vweird.f32 %v316
      %vm362 = vweird.f32 %v356
      %vm363 = vmor %vm361, %vm362
      %v364 = vsel %vm363, %v356, %v360
      %v365 = vand.u32 2147483647, %v316
      %vm366 = vcmp.eq.f32.partialorder %v365, 8.507059e+37
      %v367 = vand.u32 %v316, 2147483648
      %v368 = vor.u32 1.1754944e-38, %v367
      %v369 = vsel %vm366, %v368, %v364
      %v370 = vrcp.pop %v323
      %v371 = vmul.f32 %v323, %v370
      %v372 = vsub.f32 1.0, %v371
      %v373 = vmul.f32 %v370, %v372
      %v374 = vadd.f32 %v370, %v373
      %vm375 = vweird.f32 %v323
      %vm376 = vweird.f32 %v370
      %vm377 = vmor %vm375, %vm376
      %v378 = vsel %vm377, %v370, %v374
      %v379 = vand.u32 2147483647, %v323
      %vm380 = vcmp.eq.f32.partialorder %v379, 8.507059e+37
      %v381 = vand.u32 %v323, 2147483648
      %v382 = vor.u32 1.1754944e-38, %v381
      %v383 = vsel %vm380, %v382, %v378
      %v384 = vmul.f32 %v348, %v369
      %v385 = vmul.f32 %v355, %v383
      %v386 = vld [vmem:[%s205] sm:$0x3]
      %v389 = vrot.slane %v385, 7
      %vm390 = vcmask 1040384
      %v391 = vsel %vm390, %v384, %v389
      %v393 = vadd.f32 %v386, %v391
      %v394 = vlaneseq
      %vm395 = vcmp.ge.s32.totalorder %v394, 0
      %vm396 = vcmp.lt.s32.totalorder %v394, 256
      %vm397 = vmand %vm395, %vm396
      %398 = vst.msk [vmem:[%s205] sm:$0x3] %vm397, %v393
      %p399 = scmp.lt.s32.totalorder %s17, 1
      %s400 = scalar_select %p399, %s17, 1
      %s401 = smul.addr %s400, 2
      %s402 = scalar_lea.vmem %s2, %s401
      // Predicated region
      $region33: #{criterion_kl_pixel_wise.1} parent=27 // pred_check
        %p403 = pneg %p99
      $region34: #{criterion_kl_pixel_wise.1} parent=27 // pred_check_branch
        %405 = sbr.rel (%p403) target = $region36
      $region35: #{criterion_kl_pixel_wise.1} parent=27 // pred_region
        _
      $region36: #{criterion_kl_pixel_wise.1} parent=27 // pred_fallthru
        _
    $region28: #{criterion_kl_pixel_wise.1} parent=5 // pred_fallthru
      _
    %p406 = scmp.le.s32.totalorder 2, %s8
    // Predicated region
    $region37: #{criterion_kl_pixel_wise.1} parent=5 // pred_check
      %p407 = pneg %p406
    $region38: #{criterion_kl_pixel_wise.1} parent=5 // pred_check_branch
      %409 = sbr.rel (%p407) target = $region40
    $region39: #{criterion_kl_pixel_wise.1} parent=5 // pred_region
      %s410 = ssub.s32 %s8, 2
      // Predicated region
      $region41: #{criterion_kl_pixel_wise.1} parent=39 // pred_check
        %p411 = pneg %p105
      $region42: #{criterion_kl_pixel_wise.1} parent=39 // pred_check_branch
        %413 = sbr.rel (%p411) target = $region44
      $region43: #{criterion_kl_pixel_wise.1} parent=39 // pred_region
        %p414 = scmp.lt.s32.totalorder %s19, 1
        %s415 = scalar_select %p414, %s19, 1
        %s416 = smul.addr %s415, 2
        %s417 = scalar_lea.vmem %s2, %s416
      $region44: #{criterion_kl_pixel_wise.1} parent=39 // pred_fallthru
        _
    $region40: #{criterion_kl_pixel_wise.1} parent=5 // pred_fallthru
      _
  $region6: #{criterion_kl_pixel_wise.1} parent=0 // loop_footer
    %s12 = sadd.s32 1, %s8
  $region7: #{criterion_kl_pixel_wise.1} parent=0 // loop_footer_branch
    %7 = sbr.rel target = $region3
  $region8: #{criterion_kl_pixel_wise.1} parent=0 // loop_exit
    _

</llo_original>
